<compile_context>
chip_gen: v7x
topology: tpu7x:2x2x1
jax: 0.10.0
libtpu: 0.0.40
codegen_flags: <defaults>
</compile_context>

<pallas_src>
import functools

import jax
import jax.numpy as jnp
from jax.experimental import pallas as pl
from jax.experimental.pallas import tpu as pltpu

LN_EPS = 1e-5


def _round_up(a, b):
    return ((a + b - 1) // b) * b


def _vmem_limit_bytes():
    """Use most of physical VMEM; fall back to a conservative 64 MiB."""
    try:
        cap = int(pltpu.get_tpu_info().vmem_capacity_bytes)
    except Exception:
        cap = 64 * 1024 * 1024
    return max(32 * 1024 * 1024, min(int(cap * 0.85), 112 * 1024 * 1024))


def _ln_act(v, gamma, beta, valid_f):
    """LayerNorm (torch semantics: biased var, eps inside rsqrt) over the first
    `valid_f` lanes of the 128-padded feature dim, then ReLU.  gamma/beta are
    zero-padded, so padded lanes of the result are exactly zero.  Math in f32."""
    v = v.astype(jnp.float32)
    f_pad = v.shape[-1]
    lane = jax.lax.broadcasted_iota(jnp.int32, (1, f_pad), 1)
    mask = (lane < valid_f).astype(v.dtype)
    inv_f = 1.0 / valid_f
    mean = jnp.sum(v * mask, axis=-1, keepdims=True) * inv_f
    d = (v - mean) * mask
    var = jnp.sum(d * d, axis=-1, keepdims=True) * inv_f
    vn = d * jax.lax.rsqrt(var + LN_EPS)
    return jnp.maximum(vn * gamma.astype(v.dtype) + beta.astype(v.dtype), 0.0)


# ---------------- Kernel 1: node LayerNorm + ReLU (tiled over nodes) ---------
def _node_norm_kernel(x_ref, gamma_ref, beta_ref, h_ref, *, valid_f):
    h_ref[...] = _ln_act(x_ref[...], gamma_ref[...], beta_ref[...],
                         valid_f).astype(h_ref.dtype)


# ---------------- Kernel 2: edge conv + scatter-add + fused node GEMM --------
def _edge_conv_kernel(src_ref, dst_ref,                   # scalar-prefetch (SMEM)
                      h_ref, ea_ref, gamma_ref, beta_ref, we_ref, wn_ref, be_ref,
                      eout_ref, hpart_ref,                # outputs
                      msg_ref, agg_ref,                   # VMEM scratch
                      *, valid_f, valid_e, edge_tile, tiles_per_core,
                      edges_per_core):
    c = pl.program_id(0)          # core / edge-half index ("parallel")
    t = pl.program_id(1)          # edge tile within this half ("arbitrary")

    @pl.when(t == 0)
    def _init():
        agg_ref[...] = jnp.zeros_like(agg_ref)

    base = c * edges_per_core + t * edge_tile

    # Edge branch: LayerNorm + ReLU (dropout p=0 is identity).  f32 math.
    g = _ln_act(ea_ref[...], gamma_ref[...], beta_ref[...], valid_f)

    # Gather h[src] for this edge tile (h is bf16 VMEM-resident).  Unrolled so
    # the scheduler can pipeline the scalar index reads and the row copies.
    def gather_body(i, carry):
        s = src_ref[base + i]
        msg_ref[pl.ds(i, 1), :] = h_ref[pl.ds(s, 1), :].astype(jnp.float32)
        return carry

    jax.lax.fori_loop(0, edge_tile, gather_body, 0, unroll=8)

    msg = msg_ref[...] + g                                  # (TE, F_pad) f32

    # Edge update (bf16 MXU, f32 accumulate) + residual (re-read ea here so it
    # is not held live across the gather and the GEMM).
    g_out = jnp.dot(msg.astype(we_ref.dtype), we_ref[...],
                    preferred_element_type=jnp.float32) + be_ref[...]
    eout_ref[...] = (ea_ref[...] + g_out).astype(eout_ref.dtype)

    # Zero padded-edge rows, then scatter-add into this core's accumulator.
    row = jax.lax.broadcasted_iota(jnp.int32, (edge_tile, 1), 0) + base
    msg_ref[...] = msg * (row < valid_e).astype(msg.dtype)

    def scatter_body(i, carry):
        d = dst_ref[base + i]
        agg_ref[pl.ds(d, 1), :] = (agg_ref[pl.ds(d, 1), :]
                                   + msg_ref[pl.ds(i, 1), :])
        return carry

    jax.lax.fori_loop(0, edge_tile, scatter_body, 0, unroll=8)

    # Finalize: fused node GEMM on the VMEM-resident accumulator.  Bias is
    # added once in kernel 3 (partials from both halves are summed there).
    @pl.when(t == tiles_per_core - 1)
    def _finalize():
        hpart_ref[...] = jnp.dot(agg_ref[...].astype(wn_ref.dtype),
                                 wn_ref[...],
                                 preferred_element_type=jnp.float32)


# ---------------- Kernel 3: residual add (tiled over nodes) ------------------
def _residual_kernel(x_ref, hp_ref, bn_ref, xout_ref):
    xout_ref[...] = (x_ref[...] + hp_ref[0] + hp_ref[1]
                     + bn_ref[...]).astype(xout_ref.dtype)


def mod_deepgcn_layer(x, edge_attr, edge_index, params, *,
                      node_tile=512, edge_tile=512,
                      compute_dtype=jnp.bfloat16):
    """Forward of ModDeepGCNLayer(block='res+', dropout=0.0)."""
    N, F = x.shape
    E = edge_attr.shape[0]
    dtype = x.dtype

    F_pad = _round_up(F, 128)

    N8 = _round_up(max(N, 8), 8)
    TN = min(node_tile, N8)
    N_pad = _round_up(N8, TN)

    E8 = _round_up(max(E, 8), 8)
    TE = min(edge_tile, _round_up(pl.cdiv(E8, 2), 8))
    tiles_per_core = pl.cdiv(E8, 2 * TE)
    E_half = tiles_per_core * TE
    E_pad = 2 * E_half

    def pad2(a, r, c):
        return jnp.zeros((r, c), a.dtype).at[:a.shape[0], :a.shape[1]].set(a)

    xp = pad2(x, N_pad, F_pad)
    eap = pad2(edge_attr, E_pad, F_pad)
    gamma = pad2(params["gamma"].reshape(1, F).astype(jnp.float32), 1, F_pad)
    beta = pad2(params["beta"].reshape(1, F).astype(jnp.float32), 1, F_pad)
    wn = pad2(params["wn"].astype(compute_dtype), F_pad, F_pad)
    bn = pad2(params["bn"].reshape(1, F).astype(jnp.float32), 1, F_pad)
    we = pad2(params["we"].astype(compute_dtype), F_pad, F_pad)
    be = pad2(params["be"].reshape(1, F).astype(jnp.float32), 1, F_pad)

    src = jnp.zeros((E_pad,), jnp.int32).at[:E].set(edge_index[0].astype(jnp.int32))
    dst = jnp.zeros((E_pad,), jnp.int32).at[:E].set(edge_index[1].astype(jnp.int32))

    const2 = lambda i: (0, 0)

    # ---- Kernel 1: h = relu(LN(x)), emitted in bf16 -----------------------
    h = pl.pallas_call(
        functools.partial(_node_norm_kernel, valid_f=F),
        grid=(N_pad // TN,),
        in_specs=[
            pl.BlockSpec((TN, F_pad), lambda i: (i, 0)),
            pl.BlockSpec((1, F_pad), const2),
            pl.BlockSpec((1, F_pad), const2),
        ],
        out_specs=pl.BlockSpec((TN, F_pad), lambda i: (i, 0)),
        out_shape=jax.ShapeDtypeStruct((N_pad, F_pad), compute_dtype),
        compiler_params=pltpu.CompilerParams(
            dimension_semantics=("parallel",)),
    )(xp, gamma, beta)

    # ---- Kernel 2: edge LN+act, gather, edge GEMM, segment-sum, node GEMM --
    grid_spec = pltpu.PrefetchScalarGridSpec(
        num_scalar_prefetch=2,
        grid=(2, tiles_per_core),
        in_specs=[
            pl.BlockSpec((N_pad, F_pad), lambda c, t, s, d: (0, 0)),   # h (resident)
            pl.BlockSpec((TE, F_pad),
                         lambda c, t, s, d: (c * tiles_per_core + t, 0)),  # edge tile
            pl.BlockSpec((1, F_pad), lambda c, t, s, d: (0, 0)),       # gamma
            pl.BlockSpec((1, F_pad), lambda c, t, s, d: (0, 0)),       # beta
            pl.BlockSpec((F_pad, F_pad), lambda c, t, s, d: (0, 0)),   # W_e
            pl.BlockSpec((F_pad, F_pad), lambda c, t, s, d: (0, 0)),   # W_n
            pl.BlockSpec((1, F_pad), lambda c, t, s, d: (0, 0)),       # b_e
        ],
        out_specs=[
            pl.BlockSpec((TE, F_pad),
                         lambda c, t, s, d: (c * tiles_per_core + t, 0)),  # edge out
            pl.BlockSpec((None, N_pad, F_pad),
                         lambda c, t, s, d: (c, 0, 0)),                # partial h_out
        ],
        scratch_shapes=[pltpu.VMEM((TE, F_pad), jnp.float32),
                        pltpu.VMEM((N_pad, F_pad), jnp.float32)],
    )
    eout_p, hpart = pl.pallas_call(
        functools.partial(_edge_conv_kernel, valid_f=F, valid_e=E,
                          edge_tile=TE, tiles_per_core=tiles_per_core,
                          edges_per_core=E_half),
        grid_spec=grid_spec,
        out_shape=(jax.ShapeDtypeStruct((E_pad, F_pad), dtype),
                   jax.ShapeDtypeStruct((2, N_pad, F_pad), jnp.float32)),
        compiler_params=pltpu.CompilerParams(
            dimension_semantics=("parallel", "arbitrary"),
            vmem_limit_bytes=_vmem_limit_bytes()),
    )(src, dst, h, eap, gamma, beta, we, wn, be)

    # ---- Kernel 3: x_out = x + (partial0 + partial1) + b_n -----------------
    xout_p = pl.pallas_call(
        _residual_kernel,
        grid=(N_pad // TN,),
        in_specs=[
            pl.BlockSpec((TN, F_pad), lambda i: (i, 0)),       # x
            pl.BlockSpec((2, TN, F_pad), lambda i: (0, i, 0)), # partial h_out
            pl.BlockSpec((1, F_pad), const2),                  # b_n
        ],
        out_specs=pl.BlockSpec((TN, F_pad), lambda i: (i, 0)),
        out_shape=jax.ShapeDtypeStruct((N_pad, F_pad), dtype),
        compiler_params=pltpu.CompilerParams(
            dimension_semantics=("parallel",)),
    )(xp, hpart, bn)

    return xout_p[:N, :F], eout_p[:E, :F]


def _reference(x, edge_attr, edge_index, params):
    """Pure-JAX f32 reference of the same res+ forward (for verification)."""
    gamma = params["gamma"]
    beta = params["beta"]

    def ln_act(v):
        mu = v.mean(-1, keepdims=True)
        var = ((v - mu) ** 2).mean(-1, keepdims=True)
        vn = (v - mu) / jnp.sqrt(var + LN_EPS)
        return jnp.maximum(vn * gamma + beta, 0.0)

    h = ln_act(x)
    g = ln_act(edge_attr)
    msg = h[edge_index[0]] + g
    g_out = msg @ params["we"] + params["be"]
    agg = jax.ops.segment_sum(msg, edge_index[1], num_segments=x.shape[0])
    h_out = agg @ params["wn"] + params["bn"]
    return x + h_out, edge_attr + g_out


if __name__ == "__main__":
    N, F = 16, 32           # 16 nodes, hidden size 32
    E = 2 * N               # bidirectional ring graph -> 32 edges

    key = jax.random.PRNGKey(0)
    kx, ke, k1, k2, k3, k4 = jax.random.split(key, 6)

    x = jax.random.normal(kx, (N, F), dtype=jnp.float32)
    edge_attr = jax.random.normal(ke, (E, F), dtype=jnp.float32)

    src_fwd = jnp.arange(N, dtype=jnp.int32)
    dst_fwd = (src_fwd + 1) % N
    edge_index = jnp.stack([jnp.concatenate([src_fwd, dst_fwd]),
                            jnp.concatenate([dst_fwd, src_fwd])], axis=0)  # (2, E)

    params = {
        "gamma": jnp.ones((F,), jnp.float32),
        "beta": jnp.zeros((F,), jnp.float32),
        "wn": 0.1 * jax.random.normal(k1, (F, F), dtype=jnp.float32),
        "bn": 0.01 * jax.random.normal(k2, (F,), dtype=jnp.float32),
        "we": 0.1 * jax.random.normal(k3, (F, F), dtype=jnp.float32),
        "be": 0.01 * jax.random.normal(k4, (F,), dtype=jnp.float32),
    }

    xout, eout = mod_deepgcn_layer(x, edge_attr, edge_index, params)
    jax.block_until_ready((xout, eout))

    x_ref, e_ref = _reference(x, edge_attr, edge_index, params)
    assert xout.shape == (N, F) and eout.shape == (E, F)
    # bf16 GEMM path: tolerances loosened accordingly (LN and accumulation
    # stay f32, only h / GEMM operands are bf16).
    assert jnp.allclose(xout, x_ref, atol=5e-2, rtol=5e-2)
    assert jnp.allclose(eout, e_ref, atol=5e-2, rtol=5e-2)

    print("KERNEL_OK")
</pallas_src>

<mosaic_0001>
module attributes {stable_mosaic.version = 11 : i64} {
  func.func @_node_norm_kernel(%arg0: i32, %arg1: memref<16x128xf32, #tpu.memory_space<vmem>>, %arg2: memref<1x128xf32, #tpu.memory_space<vmem>>, %arg3: memref<1x128xf32, #tpu.memory_space<vmem>>, %arg4: memref<16x128xbf16, #tpu.memory_space<vmem>>) attributes {dimension_semantics = [#tpu.dimension_semantics<parallel>], iteration_bounds = array<i64: 1>, scalar_prefetch = 0 : i64, scratch_operands = 0 : i64, tpu.core_type = #tpu.core_type<tc>, window_params = [{transform_indices = @transform_0, window_bounds = array<i64: 16, 128>}, {pipeline_mode = #tpu.pipeline_mode<synchronous>, transform_indices = @transform_1, window_bounds = array<i64: 1, 128>}, {pipeline_mode = #tpu.pipeline_mode<synchronous>, transform_indices = @transform_2, window_bounds = array<i64: 1, 128>}, {transform_indices = @transform_3, window_bounds = array<i64: 16, 128>}]} {
    %c0 = arith.constant 0 : index
    %c0_0 = arith.constant 0 : index
    %0 = vector.load %arg1[%c0, %c0_0] : memref<16x128xf32, #tpu.memory_space<vmem>>, vector<16x128xf32>
    %c0_1 = arith.constant 0 : index
    %c0_2 = arith.constant 0 : index
    %1 = vector.load %arg2[%c0_1, %c0_2] : memref<1x128xf32, #tpu.memory_space<vmem>>, vector<1x128xf32>
    %c0_3 = arith.constant 0 : index
    %c0_4 = arith.constant 0 : index
    %2 = vector.load %arg3[%c0_3, %c0_4] : memref<1x128xf32, #tpu.memory_space<vmem>>, vector<1x128xf32>
    %3 = tpu.iota {dimensions = array<i32: 1>} : vector<1x128xi32>
    %c32_i32 = arith.constant 32 : i32
    %4 = vector.broadcast %c32_i32 : i32 to vector<1x128xi32>
    %5 = arith.cmpi slt, %3, %4 : vector<1x128xi32>
    %6 = arith.extui %5 : vector<1x128xi1> to vector<1x128xi32>
    %7 = arith.sitofp %6 : vector<1x128xi32> to vector<1x128xf32>
    %8 = vector.broadcast %7 : vector<1x128xf32> to vector<16x128xf32>
    %9 = arith.mulf %0, %8 : vector<16x128xf32>
    %cst = arith.constant dense<0.000000e+00> : vector<16xf32>
    %10 = vector.multi_reduction <add>, %9, %cst [1] : vector<16x128xf32> to vector<16xf32>
    %11 = vector.shape_cast %10 : vector<16xf32> to vector<16x1xf32>
    %cst_5 = arith.constant 3.125000e-02 : f32
    %12 = vector.broadcast %cst_5 : f32 to vector<16x1xf32>
    %13 = arith.mulf %11, %12 : vector<16x1xf32>
    %14 = vector.broadcast %13 : vector<16x1xf32> to vector<16x128xf32>
    %15 = arith.subf %0, %14 : vector<16x128xf32>
    %16 = vector.broadcast %7 : vector<1x128xf32> to vector<16x128xf32>
    %17 = arith.mulf %15, %16 : vector<16x128xf32>
    %18 = arith.mulf %17, %17 : vector<16x128xf32>
    %cst_6 = arith.constant dense<0.000000e+00> : vector<16xf32>
    %19 = vector.multi_reduction <add>, %18, %cst_6 [1] : vector<16x128xf32> to vector<16xf32>
    %20 = vector.shape_cast %19 : vector<16xf32> to vector<16x1xf32>
    %cst_7 = arith.constant 3.125000e-02 : f32
    %21 = vector.broadcast %cst_7 : f32 to vector<16x1xf32>
    %22 = arith.mulf %20, %21 : vector<16x1xf32>
    %cst_8 = arith.constant 9.99999974E-6 : f32
    %23 = vector.broadcast %cst_8 : f32 to vector<16x1xf32>
    %24 = arith.addf %22, %23 : vector<16x1xf32>
    %25 = math.rsqrt %24 : vector<16x1xf32>
    %26 = vector.broadcast %25 : vector<16x1xf32> to vector<16x128xf32>
    %27 = arith.mulf %17, %26 : vector<16x128xf32>
    %28 = vector.broadcast %1 : vector<1x128xf32> to vector<16x128xf32>
    %29 = arith.mulf %27, %28 : vector<16x128xf32>
    %30 = vector.broadcast %2 : vector<1x128xf32> to vector<16x128xf32>
    %31 = arith.addf %29, %30 : vector<16x128xf32>
    %cst_9 = arith.constant 0.000000e+00 : f32
    %32 = vector.broadcast %cst_9 : f32 to vector<16x128xf32>
    %33 = arith.maximumf %31, %32 : vector<16x128xf32>
    %34 = arith.truncf %33 : vector<16x128xf32> to vector<16x128xbf16>
    %c0_10 = arith.constant 0 : index
    %c0_11 = arith.constant 0 : index
    %35 = vector.load %arg4[%c0_10, %c0_11] : memref<16x128xbf16, #tpu.memory_space<vmem>>, vector<16x128xbf16>
    tpu.vector_store %arg4[%c0_10, %c0_11], %34 {strides = array<i32>} : memref<16x128xbf16, #tpu.memory_space<vmem>>, vector<16x128xbf16>,
    return
  }
  func.func @transform_0(%arg0: i32) -> (i32, i32) {
    %c0_i32 = arith.constant 0 : i32
    %c0_i32_0 = arith.constant 0 : i32
    return %arg0, %c0_i32 : i32, i32
  }
  func.func @transform_1(%arg0: i32) -> (i32, i32) {
    %c0_i32 = arith.constant 0 : i32
    %c0_i32_0 = arith.constant 0 : i32
    %c0_i32_1 = arith.constant 0 : i32
    return %c0_i32, %c0_i32_0 : i32, i32
  }
  func.func @transform_2(%arg0: i32) -> (i32, i32) {
    %c0_i32 = arith.constant 0 : i32
    %c0_i32_0 = arith.constant 0 : i32
    %c0_i32_1 = arith.constant 0 : i32
    return %c0_i32, %c0_i32_0 : i32, i32
  }
  func.func @transform_3(%arg0: i32) -> (i32, i32) {
    %c0_i32 = arith.constant 0 : i32
    %c0_i32_0 = arith.constant 0 : i32
    return %arg0, %c0_i32 : i32, i32
  }
}

</mosaic_0001>

<llo_original>
// kernel: tpu_custom_call.1
$region0: #{tpu_custom_call.1}
  #allocation0 [shape = 'u32[]', space=smem, size = 0x4, offset = 0x4, fixed_abs, tag = 'smem constant byte address 0x4 - core index']
  #allocation1 [shape = 'u32[144,128]{1,0:T(1,128)}', space=vmem, size = 0x12000, scoped, tag = 'internal scratch']
  %s0 = inlined_call_operand.hbm [shape: f32[16,128], index: 0, kind: input, shape index: {}]
  %s1 = inlined_call_operand.vmem [shape: f32[1,128], index: 1, kind: input, shape index: {}]
  %s2 = inlined_call_operand.vmem [shape: f32[1,128], index: 2, kind: input, shape index: {}]
  %s3 = inlined_call_operand.hbm [shape: bf16[16,128], index: 3, kind: output, shape index: {}]
  %s4 = sld [smem:[#allocation0]]
  $region26: #{tpu_custom_call.1} parent=0
    _
  %s6 = ssub.s32 1, %s4
  %s7 = scalar_select 0, %s6, %s4
  $region1: #{tpu_custom_call.1} parent=0
    #allocation2 [shape = 'u8[8192]{0}', space=vmem, size = 0x2000, scoped, tag = 'input window, operand 0, single buffered']
    #allocation3 [shape = 's32[1]{0}', space=sflag, size = 0x4, scoped, tag = 'scoped memory for tpu_custom_call.1']
    #allocation4 [shape = 's32[1]{0}', space=sflag, size = 0x4, scoped, tag = 'scoped memory for tpu_custom_call.1']
    #allocation5 [shape = 'u8[4096]{0}', space=vmem, size = 0x1000, scoped, tag = 'output window, operand 0, single buffered']
    %8 = vsyncpa [#allocation3], 0
    %9 = vsyncpa [#allocation4], 0
    // Predicated region
    $region2: #{tpu_custom_call.1} parent=1 // pred_check
      _
    $region3: #{tpu_custom_call.1} parent=1 // pred_check_branch
      %11 = sbr.rel (0) target = $region5
    $region4: #{tpu_custom_call.1} parent=1 // pred_region
      %s13 = ssub.s32 256, 256
      %14 = vsyncadd [#allocation3], %s13
      %s15 = sshll.u32 [#allocation2], 4
      %s16 = int_to_ptr.vmem [resolvable:$true] %s15
      %21 = dma.hbm_to_vmem [thread:$0]  %s0, 256, %s16, [#allocation3], 128, 128, 8
    $region5: #{tpu_custom_call.1} parent=1 // pred_fallthru
      _
    // Predicated region
    $region6: #{tpu_custom_call.1} parent=1 // pred_check
      _
    $region7: #{tpu_custom_call.1} parent=1 // pred_check_branch
      %23 = sbr.rel (0) target = $region9
    $region8: #{tpu_custom_call.1} parent=1 // pred_region
      _
    $region9: #{tpu_custom_call.1} parent=1 // pred_fallthru
      _
    // Predicated region
    $region10: #{tpu_custom_call.1} parent=1 // pred_check
      _
    $region11: #{tpu_custom_call.1} parent=1 // pred_check_branch
      %25 = sbr.rel (0) target = $region13
    $region12: #{tpu_custom_call.1} parent=1 // pred_region
      _
    $region13: #{tpu_custom_call.1} parent=1 // pred_fallthru
      _
    // Predicated region
    $region14: #{tpu_custom_call.1} parent=1 // pred_check
      _
    $region15: #{tpu_custom_call.1} parent=1 // pred_check_branch
      %27 = sbr.rel (0) target = $region17
    $region16: #{tpu_custom_call.1} parent=1 // pred_region
      %28 = dma.done [#allocation3], 256
    $region17: #{tpu_custom_call.1} parent=1 // pred_fallthru
      _
    %v29 = vld [vmem:[#allocation2] sm:$0xff]
    %v30 = vld [vmem:[#allocation2 + $0x8] sm:$0xff]
    %v31 = vld [vmem:[%s1] sm:$0x1]
    %v32 = vld [vmem:[%s2] sm:$0x1]
    %v33 = vlaneseq
    %v34 = vand.u32 %v33, 127
    %vm35 = vcmp.lt.s32.totalorder %v34, 32
    %v36 = vsel %vm35, 1, 0
    %v37 = vcvt.s32.f32 %v36
    %v38 = vmul.f32 %v29, %v37
    %v39 = vmul.f32 %v30, %v37
    %40 = vadd.xlane.f32.xlu0 %v38
    %v41 = vpop.xlane.xlu0 %40
    %42 = vadd.xlane.f32.xlu0 %v39
    %v43 = vpop.xlane.xlu0 %42
    %v44 = vmul.f32 %v41, 0.03125
    %v45 = vmul.f32 %v43, 0.03125
    %v46 = vsub.f32 %v29, %v44
    %v47 = vsub.f32 %v30, %v45
    %v48 = vmul.f32 %v46, %v37
    %v49 = vmul.f32 %v47, %v37
    %v50 = vmul.f32 %v48, %v48
    %v51 = vmul.f32 %v49, %v49
    %52 = vadd.xlane.f32.xlu0 %v50
    %v53 = vpop.xlane.xlu0 %52
    %54 = vadd.xlane.f32.xlu0 %v51
    %v55 = vpop.xlane.xlu0 %54
    %v56 = vmul.f32 %v53, 0.03125
    %v57 = vmul.f32 %v55, 0.03125
    %v58 = vadd.f32 %v56, 1e-05
    %v59 = vadd.f32 %v57, 1e-05
    %v60 = vrsqrt.pop %v58
    %v61 = vrsqrt.pop %v59
    %v62 = vmul.f32 %v48, %v60
    %v63 = vmul.f32 %v49, %v61
    %v65 = vlaneseq
    %v66 = vshrl.u32 %v65, 7
    %v67 = vsub.s32 0, %v66
    %v68 = vrot.slane %v31, %v67
    %v70 = vmul.f32 %v62, %v68
    %v71 = vmul.f32 %v63, %v68
    %v73 = vlaneseq
    %v74 = vshrl.u32 %v73, 7
    %v75 = vsub.s32 0, %v74
    %v76 = vrot.slane %v32, %v75
    %v78 = vadd.f32 %v70, %v76
    %v79 = vadd.f32 %v71, %v76
    %v80 = vmax.f32 %v78, 0.0
    %v81 = vmax.f32 %v79, 0.0
    %v82 = vpack.c.bf16 %v81, %v80
    %v84 = vunpack.c.l.b16 %v82
    %v85 = vunpack.c.h.b16 %v82
    %v86 = vpack.c.b16 %v84, %v84
    %v87 = vpack.c.b16 %v85, %v85
    %90 = vst [vmem:[#allocation5] sm:$0xf] %v86
    %91 = vst [vmem:[#allocation5 + $0x4] sm:$0xf] %v87
    // Predicated region
    $region18: #{tpu_custom_call.1} parent=1 // pred_check
      _
    $region19: #{tpu_custom_call.1} parent=1 // pred_check_branch
      %93 = sbr.rel (0) target = $region21
    $region20: #{tpu_custom_call.1} parent=1 // pred_region
      %s95 = ssub.s32 128, 128
      %96 = vsyncadd [#allocation4], %s95
      %s97 = sshll.u32 [#allocation5], 4
      %s98 = int_to_ptr.vmem [resolvable:$true] %s97
      %103 = dma.vmem_to_hbm [thread:$0]  %s98, 128, %s3, [#allocation4], 64, 64, 4
    $region21: #{tpu_custom_call.1} parent=1 // pred_fallthru
      _
    // Predicated region
    $region22: #{tpu_custom_call.1} parent=1 // pred_check
      _
    $region23: #{tpu_custom_call.1} parent=1 // pred_check_branch
      %105 = sbr.rel (0) target = $region25
    $region24: #{tpu_custom_call.1} parent=1 // pred_region
      %106 = dma.done [#allocation4], 128
    $region25: #{tpu_custom_call.1} parent=1 // pred_fallthru
      _
    %107 = vsyncpa [#allocation3], 1
    %108 = vsyncpa [#allocation4], 1

</llo_original>
